<compile_context>
chip_gen: v6e
topology: v6e:2x2x1
jax: 0.10.0
libtpu: 0.0.40
codegen_flags: <defaults>
</compile_context>

<pallas_src>
import functools

import jax
import jax.numpy as jnp
from jax.experimental import pallas as pl
from jax.experimental.pallas import tpu as pltpu


def _round_up(x, m):
    return ((x + m - 1) // m) * m


def _cdiv(a, b):
    return (a + b - 1) // b


def _vmem_budget_bytes():
    """Per-generation VMEM budget (bytes) and an is-v7x flag, at trace time."""
    kind = ""
    try:
        kind = jax.devices()[0].device_kind.lower()
    except Exception:
        pass
    if "v2" in kind or "v3" in kind:        # 16 MiB VMEM parts
        return 12 * 1024 * 1024, False
    if "7" in kind:                          # v7x: 64 MiB physical, 2 TCs
        return 48 * 1024 * 1024, True
    return 96 * 1024 * 1024, False           # v4 / v5e / v5p / v6e: 128 MiB


def _d3_kernel(x_ref, w1_ref, b1_ref, w2_ref, b2_ref, w3_ref, b3_ref,
               w4_ref, b4_ref, o_ref, acc_ref, *, tk, w1_resident):
    """Fused D3 forward on one (block_b, tk) tile of x.

    Grid = (batch tiles, K tiles).  Layer-1 partial products accumulate into an
    f32 VMEM scratch across the K axis; the MLP tail + softmax run only on the
    last K step.
    """
    k = pl.program_id(1)

    @pl.when(k == 0)
    def _init():
        acc_ref[...] = jnp.zeros_like(acc_ref)

    if w1_resident:
        # W1 is one VMEM-resident block (constant block index -> single DMA for
        # the whole kernel); select this K chunk with an aligned dynamic slice.
        start = pl.multiple_of(k * tk, tk)
        w1_blk = w1_ref[pl.ds(start, tk), :]
    else:
        w1_blk = w1_ref[...]

    # Layer-1 partial product for this K chunk (MXU, f32 accumulation).
    acc_ref[...] += jnp.dot(x_ref[...], w1_blk,
                            preferred_element_type=jnp.float32)

    @pl.when(k == pl.num_programs(1) - 1)
    def _tail():
        dt = w2_ref.dtype                     # f32 or bf16 storage dtype
        h = jnp.maximum(acc_ref[...] + b1_ref[...], 0.0)
        h = jnp.dot(h.astype(dt), w2_ref[...],
                    preferred_element_type=jnp.float32) + b2_ref[...]
        h = jnp.maximum(h, 0.0)
        h = jnp.dot(h.astype(dt), w3_ref[...],
                    preferred_element_type=jnp.float32) + b3_ref[...]
        h = jnp.maximum(h, 0.0)
        logits = jnp.dot(h.astype(dt), w4_ref[...],
                         preferred_element_type=jnp.float32) + b4_ref[...]

        # Numerically stable softmax over the lane-dense (128-wide) feature
        # axis.  Padded columns carry a -inf bias -> exp() == 0 exactly.
        m = jnp.max(logits, axis=-1, keepdims=True)
        e = jnp.exp(logits - m)
        denom = jnp.sum(e, axis=-1, keepdims=True)
        inv = pl.reciprocal(denom, approx=True)   # EUP slot (otherwise idle)
        inv = inv * (2.0 - denom * inv)           # one Newton step -> f32 accuracy
        o_ref[...] = (e * inv).astype(o_ref.dtype)


@functools.partial(jax.jit,
                   static_argnames=("block_b", "block_k", "cast_to_bf16"))
def d3_forward(x, params, block_b=None, block_k=1024, cast_to_bf16=False):
    """x: (B, gene_size).  params: transposed weights (in, out) + biases (1, out)."""
    B, gene_size = x.shape
    w1, b1 = params["w1"], params["b1"]   # (gene_size, 256), (1, 256)
    w2, b2 = params["w2"], params["b2"]   # (256, 64),        (1, 64)
    w3, b3 = params["w3"], params["b3"]   # (64, 32),         (1, 32)
    w4, b4 = params["w4"], params["b4"]   # (32, unit),       (1, unit)
    unit = w4.shape[1]

    budget, is_v7x = _vmem_budget_bytes()
    itemsize = 2 if cast_to_bf16 else 4
    mult = 16 if cast_to_bf16 else 8

    # ---- K tiling with minimal (<128 per chunk) padding ----
    num_k = max(1, _cdiv(gene_size, block_k))
    tk = _round_up(_cdiv(gene_size, num_k), 128)
    kp = num_k * tk

    # ---- lane-dense output: pad unit -> multiple of 128 ----
    n_pad = max(128, _round_up(unit, 128))

    # ---- W1 residency + batch-tile sizing from the VMEM budget ----
    w1_resident = (2 * kp * 256 * itemsize) <= budget // 2
    w1_vmem = 2 * (kp if w1_resident else tk) * 256 * itemsize
    const_vmem = 2 * ((256 * 64 + 64 * 32 + 32 * n_pad) * itemsize
                      + (256 + 64 + 32 + n_pad) * 4)
    per_row = 2 * tk * itemsize + 256 * 4 + 2 * n_pad * 4
    avail = budget - w1_vmem - const_vmem - (1 << 20)
    row_cap = max(mult, (avail // per_row) // mult * mult)

    if block_b is None:
        block_b = 1024 if is_v7x else 2048
    block_b = min(_round_up(block_b, mult), _round_up(B, mult), row_cap)
    if is_v7x:
        # Keep >= 2 batch tiles so the "parallel" axis shards across both TCs.
        block_b = min(block_b, _round_up(_cdiv(B, 2), mult))
    block_b = max(block_b, mult)

    bp = _round_up(B, block_b)
    num_b = bp // block_b

    # ---- fused pad + cast of the large operands (zero-padded K contributes 0) ----
    if cast_to_bf16:
        x = x.astype(jnp.bfloat16)
        w1 = w1.astype(jnp.bfloat16)
        w2 = w2.astype(jnp.bfloat16)
        w3 = w3.astype(jnp.bfloat16)
        w4 = w4.astype(jnp.bfloat16)
    if bp != B or kp != gene_size:
        x = jnp.pad(x, ((0, bp - B), (0, kp - gene_size)))
    if kp != gene_size:
        w1 = jnp.pad(w1, ((0, kp - gene_size), (0, 0)))
    if n_pad != unit:
        w4 = jnp.pad(w4, ((0, 0), (0, n_pad - unit)))
        b4 = jnp.pad(b4, ((0, 0), (0, n_pad - unit)), constant_values=-jnp.inf)
    # biases stay f32 (exact -inf padding; negligible HBM traffic)

    def const_spec(arr):
        # Constant block index -> fetched from HBM once, stays VMEM-resident.
        return pl.BlockSpec(arr.shape, lambda i, k: (0, 0))

    if w1_resident:
        w1_spec = pl.BlockSpec((kp, 256), lambda i, k: (0, 0))
    else:
        w1_spec = pl.BlockSpec((tk, 256), lambda i, k: (k, 0))

    kernel = functools.partial(_d3_kernel, tk=tk, w1_resident=w1_resident)

    out = pl.pallas_call(
        kernel,
        out_shape=jax.ShapeDtypeStruct((bp, n_pad), jnp.float32),
        grid_spec=pltpu.PrefetchScalarGridSpec(
            num_scalar_prefetch=0,
            grid=(num_b, num_k),
            in_specs=[
                pl.BlockSpec((block_b, tk), lambda i, k: (i, k)),   # x tile
                w1_spec,                                            # W1 (resident or K-streamed)
                const_spec(b1),
                const_spec(w2), const_spec(b2),
                const_spec(w3), const_spec(b3),
                const_spec(w4), const_spec(b4),
            ],
            out_specs=pl.BlockSpec((block_b, n_pad), lambda i, k: (i, 0)),
            scratch_shapes=[pltpu.VMEM((block_b, 256), jnp.float32)],
        ),
        compiler_params=pltpu.CompilerParams(
            dimension_semantics=("parallel", "arbitrary"),
            vmem_limit_bytes=budget,
        ),
    )(x, w1, b1, w2, b2, w3, b3, w4, b4)

    return out[:B, :unit]


def init_d3_params(key, gene_size, unit):
    """PyTorch-style uniform(+-1/sqrt(fan_in)) init; weights stored transposed."""
    dims = [(gene_size, 256), (256, 64), (64, 32), (32, unit)]
    params = {}
    for idx, (fan_in, fan_out) in enumerate(dims, start=1):
        key, kw, kb = jax.random.split(key, 3)
        bound = 1.0 / jnp.sqrt(float(fan_in))
        params[f"w{idx}"] = jax.random.uniform(
            kw, (fan_in, fan_out), jnp.float32, -bound, bound)
        params[f"b{idx}"] = jax.random.uniform(
            kb, (1, fan_out), jnp.float32, -bound, bound)
    return params


def _reference(x, p):
    h = jnp.maximum(x @ p["w1"] + p["b1"], 0.0)
    h = jnp.maximum(h @ p["w2"] + p["b2"], 0.0)
    h = jnp.maximum(h @ p["w3"] + p["b3"], 0.0)
    logits = h @ p["w4"] + p["b4"]
    return jax.nn.softmax(logits, axis=1)


if __name__ == "__main__":
    key = jax.random.PRNGKey(0)

    # ---- small shape (single K step, resident W1) ----
    gene_size, unit, batch = 32, 8, 16
    key, kx, kparams = jax.random.split(key, 3)
    x = jax.random.normal(kx, (batch, gene_size), jnp.float32)
    params = init_d3_params(kparams, gene_size, unit)

    out = jax.block_until_ready(d3_forward(x, params))
    ref = _reference(x, params)
    assert out.shape == (batch, unit)
    assert jnp.allclose(out, ref, atol=1e-5, rtol=1e-5), "f32 mismatch vs reference"
    assert jnp.allclose(jnp.sum(out, axis=1), 1.0, atol=1e-5)

    # ---- multi-K path (K-tiled accumulation, ragged batch/K padding) ----
    gene_size2, unit2, batch2 = 300, 10, 50
    key, kx2, kparams2 = jax.random.split(key, 3)
    x2 = jax.random.normal(kx2, (batch2, gene_size2), jnp.float32)
    params2 = init_d3_params(kparams2, gene_size2, unit2)

    out2 = jax.block_until_ready(d3_forward(x2, params2, block_k=128))
    ref2 = _reference(x2, params2)
    assert out2.shape == (batch2, unit2)
    assert jnp.allclose(out2, ref2, atol=1e-5, rtol=1e-5), "multi-K mismatch vs reference"

    # ---- bf16 storage path (HBM-traffic halving; looser tolerance) ----
    out_bf16 = jax.block_until_ready(d3_forward(x, params, cast_to_bf16=True))
    assert jnp.allclose(out_bf16, ref, atol=2e-2, rtol=2e-2), "bf16 mismatch vs reference"

    print("KERNEL_OK")
</pallas_src>

<mosaic_0001>
module attributes {stable_mosaic.version = 11 : i64} {
  func.func @_d3_kernel(%arg0: i32, %arg1: i32, %arg2: memref<16x128xf32, #tpu.memory_space<vmem>>, %arg3: memref<128x256xf32, #tpu.memory_space<vmem>>, %arg4: memref<1x256xf32, #tpu.memory_space<vmem>>, %arg5: memref<256x64xf32, #tpu.memory_space<vmem>>, %arg6: memref<1x64xf32, #tpu.memory_space<vmem>>, %arg7: memref<64x32xf32, #tpu.memory_space<vmem>>, %arg8: memref<1x32xf32, #tpu.memory_space<vmem>>, %arg9: memref<32x128xf32, #tpu.memory_space<vmem>>, %arg10: memref<1x128xf32, #tpu.memory_space<vmem>>, %arg11: memref<16x128xf32, #tpu.memory_space<vmem>>, %arg12: memref<16x256xf32, #tpu.memory_space<vmem>>) attributes {dimension_semantics = [#tpu.dimension_semantics<parallel>, #tpu.dimension_semantics<arbitrary>], iteration_bounds = array<i64: 1, 1>, scalar_prefetch = 0 : i64, scratch_operands = 1 : i64, tpu.core_type = #tpu.core_type<tc>, window_params = [{transform_indices = @transform_0, window_bounds = array<i64: 16, 128>}, {pipeline_mode = #tpu.pipeline_mode<synchronous>, transform_indices = @transform_1, window_bounds = array<i64: 128, 256>}, {pipeline_mode = #tpu.pipeline_mode<synchronous>, transform_indices = @transform_2, window_bounds = array<i64: 1, 256>}, {pipeline_mode = #tpu.pipeline_mode<synchronous>, transform_indices = @transform_3, window_bounds = array<i64: 256, 64>}, {pipeline_mode = #tpu.pipeline_mode<synchronous>, transform_indices = @transform_4, window_bounds = array<i64: 1, 64>}, {pipeline_mode = #tpu.pipeline_mode<synchronous>, transform_indices = @transform_5, window_bounds = array<i64: 64, 32>}, {pipeline_mode = #tpu.pipeline_mode<synchronous>, transform_indices = @transform_6, window_bounds = array<i64: 1, 32>}, {pipeline_mode = #tpu.pipeline_mode<synchronous>, transform_indices = @transform_7, window_bounds = array<i64: 32, 128>}, {pipeline_mode = #tpu.pipeline_mode<synchronous>, transform_indices = @transform_8, window_bounds = array<i64: 1, 128>}, {transform_indices = @transform_9, window_bounds = array<i64: 16, 128>}]} {
    %c0_i32 = arith.constant 0 : i32
    %0 = arith.cmpi eq, %arg1, %c0_i32 : i32
    %1 = arith.extui %0 : i1 to i32
    %c0_i32_0 = arith.constant 0 : i32
    %2 = arith.cmpi ne, %1, %c0_i32_0 : i32
    scf.if %2 {
      %cst_9 = arith.constant 0.000000e+00 : f32
      %15 = vector.broadcast %cst_9 : f32 to vector<16x256xf32>
      %c0_10 = arith.constant 0 : index
      %c0_11 = arith.constant 0 : index
      %16 = vector.load %arg12[%c0_10, %c0_11] : memref<16x256xf32, #tpu.memory_space<vmem>>, vector<16x256xf32>
      tpu.vector_store %arg12[%c0_10, %c0_11], %15 {strides = array<i32>} : memref<16x256xf32, #tpu.memory_space<vmem>>, vector<16x256xf32>,
    } else {
    }
    %c128_i32 = arith.constant 128 : i32
    %3 = arith.muli %arg1, %c128_i32 : i32
    %4 = tpu.assume_multiple %3, 128 : i32
    %5 = arith.index_cast %4 : i32 to index
    %c0 = arith.constant 0 : index
    %6 = vector.load %arg3[%5, %c0] : memref<128x256xf32, #tpu.memory_space<vmem>>, vector<128x256xf32>
    %c0_1 = arith.constant 0 : index
    %c0_2 = arith.constant 0 : index
    %7 = vector.load %arg12[%c0_1, %c0_2] : memref<16x256xf32, #tpu.memory_space<vmem>>, vector<16x256xf32>
    %c0_3 = arith.constant 0 : index
    %c0_4 = arith.constant 0 : index
    %8 = vector.load %arg2[%c0_3, %c0_4] : memref<16x128xf32, #tpu.memory_space<vmem>>, vector<16x128xf32>
    %cst = arith.constant dense<0.000000e+00> : vector<16x256xf32>
    %9 = tpu.matmul %8, %6, %cst {dimension_numbers = #tpu.dot_dimension_numbers<[1], [0], [0], [1], [0, 0, 1, 1], [], []>} : vector<16x128xf32>, vector<128x256xf32>, vector<16x256xf32> -> vector<16x256xf32>
    %10 = arith.addf %7, %9 : vector<16x256xf32>
    %c0_5 = arith.constant 0 : index
    %c0_6 = arith.constant 0 : index
    %11 = vector.load %arg12[%c0_5, %c0_6] : memref<16x256xf32, #tpu.memory_space<vmem>>, vector<16x256xf32>
    tpu.vector_store %arg12[%c0_5, %c0_6], %10 {strides = array<i32>} : memref<16x256xf32, #tpu.memory_space<vmem>>, vector<16x256xf32>,
    %c0_i32_7 = arith.constant 0 : i32
    %12 = arith.cmpi eq, %arg1, %c0_i32_7 : i32
    %13 = arith.extui %12 : i1 to i32
    %c0_i32_8 = arith.constant 0 : i32
    %14 = arith.cmpi ne, %13, %c0_i32_8 : i32
    scf.if %14 {
      %c0_9 = arith.constant 0 : index
      %c0_10 = arith.constant 0 : index
      %15 = vector.load %arg12[%c0_9, %c0_10] : memref<16x256xf32, #tpu.memory_space<vmem>>, vector<16x256xf32>
      %c0_11 = arith.constant 0 : index
      %c0_12 = arith.constant 0 : index
      %16 = vector.load %arg4[%c0_11, %c0_12] : memref<1x256xf32, #tpu.memory_space<vmem>>, vector<1x256xf32>
      %17 = vector.broadcast %16 : vector<1x256xf32> to vector<16x256xf32>
      %18 = arith.addf %15, %17 : vector<16x256xf32>
      %cst_13 = arith.constant 0.000000e+00 : f32
      %19 = vector.broadcast %cst_13 : f32 to vector<16x256xf32>
      %20 = arith.maximumf %18, %19 : vector<16x256xf32>
      %c0_14 = arith.constant 0 : index
      %c0_15 = arith.constant 0 : index
      %21 = vector.load %arg5[%c0_14, %c0_15] : memref<256x64xf32, #tpu.memory_space<vmem>>, vector<256x64xf32>
      %cst_16 = arith.constant dense<0.000000e+00> : vector<16x64xf32>
      %22 = tpu.matmul %20, %21, %cst_16 {dimension_numbers = #tpu.dot_dimension_numbers<[1], [0], [0], [1], [0, 0, 1, 1], [], []>} : vector<16x256xf32>, vector<256x64xf32>, vector<16x64xf32> -> vector<16x64xf32>
      %c0_17 = arith.constant 0 : index
      %c0_18 = arith.constant 0 : index
      %23 = vector.load %arg6[%c0_17, %c0_18] : memref<1x64xf32, #tpu.memory_space<vmem>>, vector<1x64xf32>
      %24 = vector.broadcast %23 : vector<1x64xf32> to vector<16x64xf32>
      %25 = arith.addf %22, %24 : vector<16x64xf32>
      %cst_19 = arith.constant 0.000000e+00 : f32
      %26 = vector.broadcast %cst_19 : f32 to vector<16x64xf32>
      %27 = arith.maximumf %25, %26 : vector<16x64xf32>
      %c0_20 = arith.constant 0 : index
      %c0_21 = arith.constant 0 : index
      %28 = vector.load %arg7[%c0_20, %c0_21] : memref<64x32xf32, #tpu.memory_space<vmem>>, vector<64x32xf32>
      %cst_22 = arith.constant dense<0.000000e+00> : vector<16x32xf32>
      %29 = tpu.matmul %27, %28, %cst_22 {dimension_numbers = #tpu.dot_dimension_numbers<[1], [0], [0], [1], [0, 0, 1, 1], [], []>} : vector<16x64xf32>, vector<64x32xf32>, vector<16x32xf32> -> vector<16x32xf32>
      %c0_23 = arith.constant 0 : index
      %c0_24 = arith.constant 0 : index
      %30 = vector.load %arg8[%c0_23, %c0_24] : memref<1x32xf32, #tpu.memory_space<vmem>>, vector<1x32xf32>
      %31 = vector.broadcast %30 : vector<1x32xf32> to vector<16x32xf32>
      %32 = arith.addf %29, %31 : vector<16x32xf32>
      %cst_25 = arith.constant 0.000000e+00 : f32
      %33 = vector.broadcast %cst_25 : f32 to vector<16x32xf32>
      %34 = arith.maximumf %32, %33 : vector<16x32xf32>
      %c0_26 = arith.constant 0 : index
      %c0_27 = arith.constant 0 : index
      %35 = vector.load %arg9[%c0_26, %c0_27] : memref<32x128xf32, #tpu.memory_space<vmem>>, vector<32x128xf32>
      %cst_28 = arith.constant dense<0.000000e+00> : vector<16x128xf32>
      %36 = tpu.matmul %34, %35, %cst_28 {dimension_numbers = #tpu.dot_dimension_numbers<[1], [0], [0], [1], [0, 0, 1, 1], [], []>} : vector<16x32xf32>, vector<32x128xf32>, vector<16x128xf32> -> vector<16x128xf32>
      %c0_29 = arith.constant 0 : index
      %c0_30 = arith.constant 0 : index
      %37 = vector.load %arg10[%c0_29, %c0_30] : memref<1x128xf32, #tpu.memory_space<vmem>>, vector<1x128xf32>
      %38 = vector.broadcast %37 : vector<1x128xf32> to vector<16x128xf32>
      %39 = arith.addf %36, %38 : vector<16x128xf32>
      %cst_31 = arith.constant dense<0xFF800000> : vector<16xf32>
      %40 = vector.multi_reduction <maximumf>, %39, %cst_31 [1] : vector<16x128xf32> to vector<16xf32>
      %41 = vector.shape_cast %40 : vector<16xf32> to vector<16x1xf32>
      %42 = vector.broadcast %41 : vector<16x1xf32> to vector<16x128xf32>
      %43 = arith.subf %39, %42 : vector<16x128xf32>
      %44 = math.exp %43 : vector<16x128xf32>
      %cst_32 = arith.constant dense<0.000000e+00> : vector<16xf32>
      %45 = vector.multi_reduction <add>, %44, %cst_32 [1] : vector<16x128xf32> to vector<16xf32>
      %46 = vector.shape_cast %45 : vector<16xf32> to vector<16x1xf32>
      %47 = tpu.reciprocal %46 {approx = true} : vector<16x1xf32> -> vector<16x1xf32>
      %48 = arith.mulf %46, %47 : vector<16x1xf32>
      %cst_33 = arith.constant 2.000000e+00 : f32
      %49 = vector.broadcast %cst_33 : f32 to vector<16x1xf32>
      %50 = arith.subf %49, %48 : vector<16x1xf32>
      %51 = arith.mulf %47, %50 : vector<16x1xf32>
      %52 = vector.broadcast %51 : vector<16x1xf32> to vector<16x128xf32>
      %53 = arith.mulf %44, %52 : vector<16x128xf32>
      %c0_34 = arith.constant 0 : index
      %c0_35 = arith.constant 0 : index
      %54 = vector.load %arg11[%c0_34, %c0_35] : memref<16x128xf32, #tpu.memory_space<vmem>>, vector<16x128xf32>
      tpu.vector_store %arg11[%c0_34, %c0_35], %53 {strides = array<i32>} : memref<16x128xf32, #tpu.memory_space<vmem>>, vector<16x128xf32>,
    } else {
    }
    return
  }
  func.func @transform_0(%arg0: i32, %arg1: i32) -> (i32, i32) {
    %c0_i32 = arith.constant 0 : i32
    return %arg0, %arg1 : i32, i32
  }
  func.func @transform_1(%arg0: i32, %arg1: i32) -> (i32, i32) {
    %c0_i32 = arith.constant 0 : i32
    %c0_i32_0 = arith.constant 0 : i32
    %c0_i32_1 = arith.constant 0 : i32
    return %c0_i32, %c0_i32_0 : i32, i32
  }
  func.func @transform_2(%arg0: i32, %arg1: i32) -> (i32, i32) {
    %c0_i32 = arith.constant 0 : i32
    %c0_i32_0 = arith.constant 0 : i32
    %c0_i32_1 = arith.constant 0 : i32
    return %c0_i32, %c0_i32_0 : i32, i32
  }
  func.func @transform_3(%arg0: i32, %arg1: i32) -> (i32, i32) {
    %c0_i32 = arith.constant 0 : i32
    %c0_i32_0 = arith.constant 0 : i32
    %c0_i32_1 = arith.constant 0 : i32
    return %c0_i32, %c0_i32_0 : i32, i32
  }
  func.func @transform_4(%arg0: i32, %arg1: i32) -> (i32, i32) {
    %c0_i32 = arith.constant 0 : i32
    %c0_i32_0 = arith.constant 0 : i32
    %c0_i32_1 = arith.constant 0 : i32
    return %c0_i32, %c0_i32_0 : i32, i32
  }
  func.func @transform_5(%arg0: i32, %arg1: i32) -> (i32, i32) {
    %c0_i32 = arith.constant 0 : i32
    %c0_i32_0 = arith.constant 0 : i32
    %c0_i32_1 = arith.constant 0 : i32
    return %c0_i32, %c0_i32_0 : i32, i32
  }
  func.func @transform_6(%arg0: i32, %arg1: i32) -> (i32, i32) {
    %c0_i32 = arith.constant 0 : i32
    %c0_i32_0 = arith.constant 0 : i32
    %c0_i32_1 = arith.constant 0 : i32
    return %c0_i32, %c0_i32_0 : i32, i32
  }
  func.func @transform_7(%arg0: i32, %arg1: i32) -> (i32, i32) {
    %c0_i32 = arith.constant 0 : i32
    %c0_i32_0 = arith.constant 0 : i32
    %c0_i32_1 = arith.constant 0 : i32
    return %c0_i32, %c0_i32_0 : i32, i32
  }
  func.func @transform_8(%arg0: i32, %arg1: i32) -> (i32, i32) {
    %c0_i32 = arith.constant 0 : i32
    %c0_i32_0 = arith.constant 0 : i32
    %c0_i32_1 = arith.constant 0 : i32
    return %c0_i32, %c0_i32_0 : i32, i32
  }
  func.func @transform_9(%arg0: i32, %arg1: i32) -> (i32, i32) {
    %c0_i32 = arith.constant 0 : i32
    %c0_i32_0 = arith.constant 0 : i32
    return %arg0, %c0_i32 : i32, i32
  }
}

</mosaic_0001>

<llo_original>
// kernel: d3_forward.1
$region0: #{d3_forward.1}
  #allocation0 [shape = 'u32[]', space=smem, size = 0x4, offset = 0x4, fixed_abs, tag = 'smem constant byte address 0x4 - core index']
  #allocation1 [shape = 'u32[144,128]{1,0:T(1,128)}', space=vmem, size = 0x12000, scoped, tag = 'internal scratch']
  #allocation2 [shape = 'f32[16,256]{1,0:T(8,128)}', space=vmem, size = 0x4000, scoped, tag = 'scratch operand']
  %s0 = inlined_call_operand.vmem [shape: f32[16,128], index: 0, kind: input, shape index: {}]
  %s1 = inlined_call_operand.vmem [shape: f32[128,256], index: 1, kind: input, shape index: {}]
  %s2 = inlined_call_operand.vmem [shape: f32[1,256], index: 2, kind: input, shape index: {}]
  %s3 = inlined_call_operand.vmem [shape: f32[256,64], index: 3, kind: input, shape index: {}]
  %s4 = inlined_call_operand.vmem [shape: f32[1,64], index: 4, kind: input, shape index: {}]
  %s5 = inlined_call_operand.vmem [shape: f32[64,32], index: 5, kind: input, shape index: {}]
  %s6 = inlined_call_operand.vmem [shape: f32[1,32], index: 6, kind: input, shape index: {}]
  %s7 = inlined_call_operand.vmem [shape: f32[32,128], index: 7, kind: input, shape index: {}]
  %s8 = inlined_call_operand.vmem [shape: f32[1,128], index: 8, kind: input, shape index: {}]
  %s9 = inlined_call_operand.vmem [shape: f32[16,128], index: 9, kind: output, shape index: {}]
  %s10 = sld [smem:[#allocation0]]
  $region54: #{d3_forward.1} parent=0
    _
  %s12 = ssub.s32 1, %s10
  %s13 = scalar_select 0, %s12, %s10
  // Predicated region
  $region2: #{d3_forward.1} parent=0 // pred_check
    _
  $region3: #{d3_forward.1} parent=0 // pred_check_branch
    %15 = sbr.rel (0) target = $region5
  $region4: #{d3_forward.1} parent=0 // pred_region
    _
  $region5: #{d3_forward.1} parent=0 // pred_fallthru
    _
  // Predicated region
  $region6: #{d3_forward.1} parent=0 // pred_check
    _
  $region7: #{d3_forward.1} parent=0 // pred_check_branch
    %17 = sbr.rel (0) target = $region9
  $region8: #{d3_forward.1} parent=0 // pred_region
    _
  $region9: #{d3_forward.1} parent=0 // pred_fallthru
    _
  // Predicated region
  $region10: #{d3_forward.1} parent=0 // pred_check
    _
  $region11: #{d3_forward.1} parent=0 // pred_check_branch
    %19 = sbr.rel (0) target = $region13
  $region12: #{d3_forward.1} parent=0 // pred_region
    _
  $region13: #{d3_forward.1} parent=0 // pred_fallthru
    _
  // Predicated region
  $region14: #{d3_forward.1} parent=0 // pred_check
    _
  $region15: #{d3_forward.1} parent=0 // pred_check_branch
    %21 = sbr.rel (0) target = $region17
  $region16: #{d3_forward.1} parent=0 // pred_region
    _
  $region17: #{d3_forward.1} parent=0 // pred_fallthru
    _
  // Predicated region
  $region18: #{d3_forward.1} parent=0 // pred_check
    _
  $region19: #{d3_forward.1} parent=0 // pred_check_branch
    %23 = sbr.rel (0) target = $region21
  $region20: #{d3_forward.1} parent=0 // pred_region
    _
  $region21: #{d3_forward.1} parent=0 // pred_fallthru
    _
  // Predicated region
  $region22: #{d3_forward.1} parent=0 // pred_check
    _
  $region23: #{d3_forward.1} parent=0 // pred_check_branch
    %25 = sbr.rel (0) target = $region25
  $region24: #{d3_forward.1} parent=0 // pred_region
    _
  $region25: #{d3_forward.1} parent=0 // pred_fallthru
    _
  // Predicated region
  $region26: #{d3_forward.1} parent=0 // pred_check
    _
  $region27: #{d3_forward.1} parent=0 // pred_check_branch
    %27 = sbr.rel (0) target = $region29
  $region28: #{d3_forward.1} parent=0 // pred_region
    _
  $region29: #{d3_forward.1} parent=0 // pred_fallthru
    _
  // Predicated region
  $region30: #{d3_forward.1} parent=0 // pred_check
    _
  $region31: #{d3_forward.1} parent=0 // pred_check_branch
    %29 = sbr.rel (0) target = $region33
  $region32: #{d3_forward.1} parent=0 // pred_region
    _
  $region33: #{d3_forward.1} parent=0 // pred_fallthru
    _
  // Predicated region
  $region34: #{d3_forward.1} parent=0 // pred_check
    _
  $region35: #{d3_forward.1} parent=0 // pred_check_branch
    %31 = sbr.rel (0) target = $region37
  $region36: #{d3_forward.1} parent=0 // pred_region
    _
  $region37: #{d3_forward.1} parent=0 // pred_fallthru
    _
  %p32 = scmp.eq.s32.totalorder 0, 0
  // Predicated region
  $region38: #{d3_forward.1} parent=0 // pred_check
    %p33 = pneg %p32
  $region39: #{d3_forward.1} parent=0 // pred_check_branch
    %35 = sbr.rel (%p33) target = $region41
  $region40: #{d3_forward.1} parent=0 // pred_region
    %36 = vst [vmem:[#allocation2] sm:$0xff] 0.0
    %37 = vst [vmem:[#allocation2 + $0x8] sm:$0xff] 0.0
    %38 = vst [vmem:[#allocation2 + $0x10] sm:$0xff] 0.0
    %39 = vst [vmem:[#allocation2 + $0x18] sm:$0xff] 0.0
  $region41: #{d3_forward.1} parent=0 // pred_fallthru
    _
  %s40 = smul.u32 0, 128
  %s41 = sshra.s32 %s40, 3
  %s42 = sand.u32 %s40, 7
  %s43 = smul.u32 %s41, 2
  %s44 = smul.addr %s43, 8
  %s45 = scalar_lea.vmem %s1, %s44
  %v46 = vld [vmem:[%s45] sm:$0xff]
  %v47 = vld [vmem:[%s45 + $0x8] sm:$0xff]
  %v48 = vld [vmem:[%s45 + $0x10] sm:$0xff]
  %v49 = vld [vmem:[%s45 + $0x18] sm:$0xff]
  %v50 = vld [vmem:[%s45 + $0x20] sm:$0xff]
  %v51 = vld [vmem:[%s45 + $0x28] sm:$0xff]
  %v52 = vld [vmem:[%s45 + $0x30] sm:$0xff]
  %v53 = vld [vmem:[%s45 + $0x38] sm:$0xff]
  %v54 = vld [vmem:[%s45 + $0x40] sm:$0xff]
  %v55 = vld [vmem:[%s45 + $0x48] sm:$0xff]
  %v56 = vld [vmem:[%s45 + $0x50] sm:$0xff]
  %v57 = vld [vmem:[%s45 + $0x58] sm:$0xff]
  %v58 = vld [vmem:[%s45 + $0x60] sm:$0xff]
  %v59 = vld [vmem:[%s45 + $0x68] sm:$0xff]
  %v60 = vld [vmem:[%s45 + $0x70] sm:$0xff]
  %v61 = vld [vmem:[%s45 + $0x78] sm:$0xff]
  %v62 = vld [vmem:[%s45 + $0x80] sm:$0xff]
  %v63 = vld [vmem:[%s45 + $0x88] sm:$0xff]
  %v64 = vld [vmem:[%s45 + $0x90] sm:$0xff]
  %v65 = vld [vmem:[%s45 + $0x98] sm:$0xff]
  %v66 = vld [vmem:[%s45 + $0xa0] sm:$0xff]
  %v67 = vld [vmem:[%s45 + $0xa8] sm:$0xff]
  %v68 = vld [vmem:[%s45 + $0xb0] sm:$0xff]
  %v69 = vld [vmem:[%s45 + $0xb8] sm:$0xff]
  %v70 = vld [vmem:[%s45 + $0xc0] sm:$0xff]
  %v71 = vld [vmem:[%s45 + $0xc8] sm:$0xff]
  %v72 = vld [vmem:[%s45 + $0xd0] sm:$0xff]
  %v73 = vld [vmem:[%s45 + $0xd8] sm:$0xff]
  %v74 = vld [vmem:[%s45 + $0xe0] sm:$0xff]
  %v75 = vld [vmem:[%s45 + $0xe8] sm:$0xff]
  %v76 = vld [vmem:[%s45 + $0xf0] sm:$0xff]
  %v77 = vld [vmem:[%s45 + $0xf8] sm:$0xff]
  %v78 = vld [vmem:[#allocation2] sm:$0xff]
  %v79 = vld [vmem:[#allocation2 + $0x8] sm:$0xff]
  %v80 = vld [vmem:[#allocation2 + $0x10] sm:$0xff]
  %v81 = vld [vmem:[#allocation2 + $0x18] sm:$0xff]
  %v82 = vld [vmem:[%s0] sm:$0xff]
  %v83 = vld [vmem:[%s0 + $0x8] sm:$0xff]
  %84 = vmatprep.subr.mxu0 %v77
  %85 = vmatpush1.msra.mxu0 %v76
  %86 = vmatprep.subr.mxu0 %v75
  %87 = vmatpush1.msra.mxu0 %v74
  %88 = vmatprep.subr.mxu0 %v73
  %89 = vmatpush1.msra.mxu0 %v72
  %90 = vmatprep.subr.mxu0 %v71
  %91 = vmatpush1.msra.mxu0 %v70
  %92 = vmatprep.subr.mxu0 %v69
  %93 = vmatpush1.msra.mxu0 %v68
  %94 = vmatprep.subr.mxu0 %v67
  %95 = vmatpush1.msra.mxu0 %v66
  %96 = vmatprep.subr.mxu0 %v65
  %97 = vmatpush1.msra.mxu0 %v64
  %98 = vmatprep.subr.mxu0 %v63
  %99 = vmatpush1.msra.mxu0 %v62
  %100 = vmatprep.subr.mxu0 %v61
  %101 = vmatpush1.msra.mxu0 %v60
  %102 = vmatprep.subr.mxu0 %v59
  %103 = vmatpush1.msra.mxu0 %v58
  %104 = vmatprep.subr.mxu0 %v57
  %105 = vmatpush1.msra.mxu0 %v56
  %106 = vmatprep.subr.mxu0 %v55
  %107 = vmatpush1.msra.mxu0 %v54
  %108 = vmatprep.subr.mxu0 %v53
  %109 = vmatpush1.msra.mxu0 %v52
  %110 = vmatprep.subr.mxu0 %v51
  %111 = vmatpush1.msra.mxu0 %v50
  %112 = vmatprep.subr.mxu0 %v49
  %113 = vmatpush1.msra.mxu0 %v48
  %114 = vmatprep.subr.mxu0 %v47
  %115 = vmatpush1.msra.mxu0 %v46
  %116 = vmatprep.subr.mxu0 0.0
  %117 = vmatpush2.msra.mxu0 0.0
  %118 = vmatprep.subr.mxu0 0.0
  %119 = vmatpush2.msra.mxu0 0.0
  %120 = vmatprep.subr.mxu0 0.0
  %121 = vmatpush2.msra.mxu0 0.0
  %122 = vmatprep.subr.mxu0 0.0
  %123 = vmatpush2.msra.mxu0 0.0
  %124 = vmatprep.subr.mxu0 0.0
  %125 = vmatpush2.msra.mxu0 0.0
  %126 = vmatprep.subr.mxu0 0.0
  %127 = vmatpush2.msra.mxu0 0.0
  %128 = vmatprep.subr.mxu0 0.0
  %129 = vmatpush2.msra.mxu0 0.0
  %130 = vmatprep.subr.mxu0 0.0
  %131 = vmatpush2.msra.mxu0 0.0
  %132 = vmatprep.subr.mxu0 0.0
  %133 = vmatpush2.msra.mxu0 0.0
  %134 = vmatprep.subr.mxu0 0.0
  %135 = vmatpush2.msra.mxu0 0.0
  %136 = vmatprep.subr.mxu0 0.0
  %137 = vmatpush2.msra.mxu0 0.0
  %138 = vmatprep.subr.mxu0 0.0
  %139 = vmatpush2.msra.mxu0 0.0
  %140 = vmatprep.subr.mxu0 0.0
  %141 = vmatpush2.msra.mxu0 0.0
  %142 = vmatprep.subr.mxu0 0.0
  %143 = vmatpush2.msra.mxu0 0.0
  %144 = vmatprep.subr.mxu0 0.0
  %145 = vmatpush2.msra.mxu0 0.0
  %146 = vmatprep.subr.mxu0 0.0
  %147 = vmatpush2.msra.mxu0 0.0
  %148 = vmatprep.mubr.f32.mxu0 0.0
  %149 = vmatmul.mubr.f32.gmra.mxu0 %v82
  %v150 = vpop.f32.mrf.mxu0
  %v151 = vadd.f32 0.0, %v150
  %v152 = vpop.f32.mrf.mxu0
  %v153 = vadd.f32 0.0, %v152
  %154 = vmatprep.mubr.f32.mxu0 0.0
  %155 = vmatmul.mubr.f32.gmra.mxu0 %v83
  %v156 = vpop.f32.mrf.mxu0
  %v157 = vadd.f32 0.0, %v156
  %v158 = vpop.f32.mrf.mxu0
  %v159 = vadd.f32 0.0, %v158
  %160 = vdwg.mxu0
  %v161 = vadd.f32 %v78, %v151
  %v162 = vadd.f32 %v79, %v153
  %v163 = vadd.f32 %v80, %v157
  %v164 = vadd.f32 %v81, %v159
  %165 = vst [vmem:[#allocation2] sm:$0xff] %v161
  %166 = vst [vmem:[#allocation2 + $0x8] sm:$0xff] %v162
  %167 = vst [vmem:[#allocation2 + $0x10] sm:$0xff] %v163
  %168 = vst [vmem:[#allocation2 + $0x18] sm:$0xff] %v164
  // Predicated region
  $region42: #{d3_forward.1} parent=0 // pred_check
    %p169 = pneg %p32
  $region43: #{d3_forward.1} parent=0 // pred_check_branch
    %171 = sbr.rel (%p169) target = $region45
  $region44: #{d3_forward.1} parent=0 // pred_region
    %v172 = vld [vmem:[#allocation2] sm:$0xff]
    %v173 = vld [vmem:[#allocation2 + $0x8] sm:$0xff]
    %v174 = vld [vmem:[#allocation2 + $0x10] sm:$0xff]
    %v175 = vld [vmem:[#allocation2 + $0x18] sm:$0xff]
    %v176 = vld [vmem:[%s2] sm:$0x3]
    %v178 = vlaneseq
    %v179 = vshrl.u32 %v178, 7
    %v180 = vsub.s32 0, %v179
    %v181 = vrot.slane %v176, %v180
    %v182 = vlaneseq
    %v183 = vshrl.u32 %v182, 7
    %v184 = vsub.s32 1, %v183
    %v185 = vrot.slane %v176, %v184
    %v188 = vadd.f32 %v172, %v181
    %v189 = vadd.f32 %v173, %v185
    %v190 = vadd.f32 %v174, %v181
    %v191 = vadd.f32 %v175, %v185
    %v192 = vmax.f32 %v188, 0.0
    %v193 = vmax.f32 %v189, 0.0
    %v194 = vmax.f32 %v190, 0.0
    %v195 = vmax.f32 %v191, 0.0
    %v196 = vld [vmem:[%s3] sm:$0xff]
    %v197 = vld [vmem:[%s3 + $0x8] sm:$0xff]
    %v198 = vld [vmem:[%s3 + $0x10] sm:$0xff]
    %v199 = vld [vmem:[%s3 + $0x18] sm:$0xff]
    %v200 = vld [vmem:[%s3 + $0x20] sm:$0xff]
    %v201 = vld [vmem:[%s3 + $0x28] sm:$0xff]
    %v202 = vld [vmem:[%s3 + $0x30] sm:$0xff]
    %v203 = vld [vmem:[%s3 + $0x38] sm:$0xff]
    %v204 = vld [vmem:[%s3 + $0x40] sm:$0xff]
    %v205 = vld [vmem:[%s3 + $0x48] sm:$0xff]
    %v206 = vld [vmem:[%s3 + $0x50] sm:$0xff]
    %v207 = vld [vmem:[%s3 + $0x58] sm:$0xff]
    %v208 = vld [vmem:[%s3 + $0x60] sm:$0xff]
    %v209 = vld [vmem:[%s3 + $0x68] sm:$0xff]
    %v210 = vld [vmem:[%s3 + $0x70] sm:$0xff]
    %v211 = vld [vmem:[%s3 + $0x78] sm:$0xff]
    %v212 = vld [vmem:[%s3 + $0x80] sm:$0xff]
    %v213 = vld [vmem:[%s3 + $0x88] sm:$0xff]
    %v214 = vld [vmem:[%s3 + $0x90] sm:$0xff]
    %v215 = vld [vmem:[%s3 + $0x98] sm:$0xff]
    %v216 = vld [vmem:[%s3 + $0xa0] sm:$0xff]
    %v217 = vld [vmem:[%s3 + $0xa8] sm:$0xff]
    %v218 = vld [vmem:[%s3 + $0xb0] sm:$0xff]
    %v219 = vld [vmem:[%s3 + $0xb8] sm:$0xff]
    %v220 = vld [vmem:[%s3 + $0xc0] sm:$0xff]
    %v221 = vld [vmem:[%s3 + $0xc8] sm:$0xff]
    %v222 = vld [vmem:[%s3 + $0xd0] sm:$0xff]
    %v223 = vld [vmem:[%s3 + $0xd8] sm:$0xff]
    %v224 = vld [vmem:[%s3 + $0xe0] sm:$0xff]
    %v225 = vld [vmem:[%s3 + $0xe8] sm:$0xff]
    %v226 = vld [vmem:[%s3 + $0xf0] sm:$0xff]
    %v227 = vld [vmem:[%s3 + $0xf8] sm:$0xff]
    %v228 = vld [vmem:[%s4] sm:$0x1]
    %v230 = vlaneseq
    %v231 = vshrl.u32 %v230, 7
    %v232 = vsub.s32 0, %v231
    %v233 = vrot.slane %v228, %v232
    %235 = vmatprep.subr.mxu0 0.0
    %236 = vmatpush1.msra.mxu0 %v211
    %237 = vmatprep.subr.mxu0 0.0
    %238 = vmatpush1.msra.mxu0 %v210
    %239 = vmatprep.subr.mxu0 0.0
    %240 = vmatpush1.msra.mxu0 %v209
    %241 = vmatprep.subr.mxu0 0.0
    %242 = vmatpush1.msra.mxu0 %v208
    %243 = vmatprep.subr.mxu0 0.0
    %244 = vmatpush1.msra.mxu0 %v207
    %245 = vmatprep.subr.mxu0 0.0
    %246 = vmatpush1.msra.mxu0 %v206
    %247 = vmatprep.subr.mxu0 0.0
    %248 = vmatpush1.msra.mxu0 %v205
    %249 = vmatprep.subr.mxu0 0.0
    %250 = vmatpush1.msra.mxu0 %v204
    %251 = vmatprep.subr.mxu0 0.0
    %252 = vmatpush1.msra.mxu0 %v203
    %253 = vmatprep.subr.mxu0 0.0
    %254 = vmatpush1.msra.mxu0 %v202
    %255 = vmatprep.subr.mxu0 0.0
    %256 = vmatpush1.msra.mxu0 %v201
    %257 = vmatprep.subr.mxu0 0.0
    %258 = vmatpush1.msra.mxu0 %v200
    %259 = vmatprep.subr.mxu0 0.0
    %260 = vmatpush1.msra.mxu0 %v199
    %261 = vmatprep.subr.mxu0 0.0
    %262 = vmatpush1.msra.mxu0 %v198
    %263 = vmatprep.subr.mxu0 0.0
    %264 = vmatpush1.msra.mxu0 %v197
    %265 = vmatprep.subr.mxu0 0.0
    %266 = vmatpush1.msra.mxu0 %v196
    %267 = vmatprep.subr.mxu0 0.0
    %268 = vmatpush2.msra.mxu0 %v227
    %269 = vmatprep.subr.mxu0 0.0
    %270 = vmatpush2.msra.mxu0 %v226
    %271 = vmatprep.subr.mxu0 0.0
    %272 = vmatpush2.msra.mxu0 %v225
    %273 = vmatprep.subr.mxu0 0.0
    %274 = vmatpush2.msra.mxu0 %v224
    %275 = vmatprep.subr.mxu0 0.0
    %276 = vmatpush2.msra.mxu0 %v223
    %277 = vmatprep.subr.mxu0 0.0
    %278 = vmatpush2.msra.mxu0 %v222
    %279 = vmatprep.subr.mxu0 0.0
    %280 = vmatpush2.msra.mxu0 %v221
    %281 = vmatprep.subr.mxu0 0.0
    %282 = vmatpush2.msra.mxu0 %v220
    %283 = vmatprep.subr.mxu0 0.0
    %284 = vmatpush2.msra.mxu0 %v219
    %285 = vmatprep.subr.mxu0 0.0
    %286 = vmatpush2.msra.mxu0 %v218
    %287 = vmatprep.subr.mxu0 0.0
    %288 = vmatpush2.msra.mxu0 %v217
    %289 = vmatprep.subr.mxu0 0.0
    %290 = vmatpush2.msra.mxu0 %v216
    %291 = vmatprep.subr.mxu0 0.0
    %292 = vmatpush2.msra.mxu0 %v215
    %293 = vmatprep.subr.mxu0 0.0
    %294 = vmatpush2.msra.mxu0 %v214
    %295 = vmatprep.subr.mxu0 0.0
    %296 = vmatpush2.msra.mxu0 %v213
    %297 = vmatprep.subr.mxu0 0.0
    %298 = vmatpush2.msra.mxu0 %v212
    %299 = vmatprep.mubr.f32.mxu0 %v193
    %300 = vmatmul.mubr.f32.gmra.mxu0 %v192
    %v301 = vpop.f32.mrf.mxu0
    %v302 = vadd.f32 %v233, %v301
    %v303 = vpop.f32.mrf.mxu0
    %304 = vmatprep.mubr.f32.mxu0 %v195
    %305 = vmatmul.mubr.f32.gmra.mxu0 %v194
    %v306 = vpop.f32.mrf.mxu0
    %v307 = vadd.f32 %v233, %v306
    %v308 = vpop.f32.mrf.mxu0
    %309 = vdwg.mxu0
    %v310 = vmax.f32 %v302, 0.0
    %v311 = vmax.f32 %v307, 0.0
    %v312 = vld [vmem:[%s5] sm:$0xff]
    %v313 = vld [vmem:[%s5 + $0x8] sm:$0xff]
    %v314 = vld [vmem:[%s5 + $0x10] sm:$0xff]
    %v315 = vld [vmem:[%s5 + $0x18] sm:$0xff]
    %v316 = vld [vmem:[%s5 + $0x20] sm:$0xff]
    %v317 = vld [vmem:[%s5 + $0x28] sm:$0xff]
    %v318 = vld [vmem:[%s5 + $0x30] sm:$0xff]
    %v319 = vld [vmem:[%s5 + $0x38] sm:$0xff]
    %v320 = vld [vmem:[%s6] sm:$0x1]
    %v322 = vlaneseq
    %v323 = vshrl.u32 %v322, 7
    %v324 = vsub.s32 0, %v323
    %v325 = vrot.slane %v320, %v324
    %vm327 = vcmask 523264
    %v329 = vsel %vm327, %v310, 0
    %v332 = vsel %vm327, %v311, 0
    %334 = vmatprep.subr.mxu0 0.0
    %335 = vmatpush1.msra.mxu0 0.0
    %336 = vmatprep.subr.mxu0 0.0
    %337 = vmatpush1.msra.mxu0 0.0
    %338 = vmatprep.subr.mxu0 0.0
    %339 = vmatpush1.msra.mxu0 0.0
    %340 = vmatprep.subr.mxu0 0.0
    %341 = vmatpush1.msra.mxu0 0.0
    %342 = vmatprep.subr.mxu0 0.0
    %343 = vmatpush1.msra.mxu0 0.0
    %344 = vmatprep.subr.mxu0 0.0
    %345 = vmatpush1.msra.mxu0 0.0
    %346 = vmatprep.subr.mxu0 0.0
    %347 = vmatpush1.msra.mxu0 0.0
    %348 = vmatprep.subr.mxu0 0.0
    %349 = vmatpush1.msra.mxu0 0.0
    %350 = vmatprep.subr.mxu0 0.0
    %351 = vmatpush1.msra.mxu0 %v319
    %352 = vmatprep.subr.mxu0 0.0
    %353 = vmatpush1.msra.mxu0 %v318
    %354 = vmatprep.subr.mxu0 0.0
    %355 = vmatpush1.msra.mxu0 %v317
    %356 = vmatprep.subr.mxu0 0.0
    %357 = vmatpush1.msra.mxu0 %v316
    %358 = vmatprep.subr.mxu0 0.0
    %359 = vmatpush1.msra.mxu0 %v315
    %360 = vmatprep.subr.mxu0 0.0
    %361 = vmatpush1.msra.mxu0 %v314
    %362 = vmatprep.subr.mxu0 0.0
    %363 = vmatpush1.msra.mxu0 %v313
    %364 = vmatprep.subr.mxu0 0.0
    %365 = vmatpush1.msra.mxu0 %v312
    %366 = vmatprep.subr.mxu0 0.0
    %367 = vmatpush2.msra.mxu0 0.0
    %368 = vmatprep.subr.mxu0 0.0
    %369 = vmatpush2.msra.mxu0 0.0
    %370 = vmatprep.subr.mxu0 0.0
    %371 = vmatpush2.msra.mxu0 0.0
    %372 = vmatprep.subr.mxu0 0.0
    %373 = vmatpush2.msra.mxu0 0.0
    %374 = vmatprep.subr.mxu0 0.0
    %375 = vmatpush2.msra.mxu0 0.0
    %376 = vmatprep.subr.mxu0 0.0
    %377 = vmatpush2.msra.mxu0 0.0
    %378 = vmatprep.subr.mxu0 0.0
    %379 = vmatpush2.msra.mxu0 0.0
    %380 = vmatprep.subr.mxu0 0.0
    %381 = vmatpush2.msra.mxu0 0.0
    %382 = vmatprep.subr.mxu0 0.0
    %383 = vmatpush2.msra.mxu0 0.0
    %384 = vmatprep.subr.mxu0 0.0
    %385 = vmatpush2.msra.mxu0 0.0
    %386 = vmatprep.subr.mxu0 0.0
    %387 = vmatpush2.msra.mxu0 0.0
    %388 = vmatprep.subr.mxu0 0.0
    %389 = vmatpush2.msra.mxu0 0.0
    %390 = vmatprep.subr.mxu0 0.0
    %391 = vmatpush2.msra.mxu0 0.0
    %392 = vmatprep.subr.mxu0 0.0
    %393 = vmatpush2.msra.mxu0 0.0
    %394 = vmatprep.subr.mxu0 0.0
    %395 = vmatpush2.msra.mxu0 0.0
    %396 = vmatprep.subr.mxu0 0.0
    %397 = vmatpush2.msra.mxu0 0.0
    %398 = vmatprep.mubr.f32.mxu0 0.0
    %399 = vmatmul.mubr.f32.gmra.mxu0 %v329
    %v400 = vpop.f32.mrf.mxu0
    %v401 = vadd.f32 %v325, %v400
    %v402 = vpop.f32.mrf.mxu0
    %403 = vmatprep.mubr.f32.mxu0 0.0
    %404 = vmatmul.mubr.f32.gmra.mxu0 %v332
    %v405 = vpop.f32.mrf.mxu0
    %v406 = vadd.f32 %v325, %v405
    %v407 = vpop.f32.mrf.mxu0
    %408 = vdwg.mxu0
    %v409 = vmax.f32 %v401, 0.0
    %v410 = vmax.f32 %v406, 0.0
    %v411 = vld [vmem:[%s7] sm:$0xff]
    %v412 = vld [vmem:[%s7 + $0x8] sm:$0xff]
    %v413 = vld [vmem:[%s7 + $0x10] sm:$0xff]
    %v414 = vld [vmem:[%s7 + $0x18] sm:$0xff]
    %v415 = vld [vmem:[%s8] sm:$0x1]
    %v417 = vlaneseq
    %v418 = vshrl.u32 %v417, 7
    %v419 = vsub.s32 0, %v418
    %v420 = vrot.slane %v415, %v419
    %vm422 = vcmask 261120
    %v424 = vsel %vm422, %v409, 0
    %v427 = vsel %vm422, %v410, 0
    %429 = vmatprep.subr.mxu0 0.0
    %430 = vmatpush1.msra.mxu0 0.0
    %431 = vmatprep.subr.mxu0 0.0
    %432 = vmatpush1.msra.mxu0 0.0
    %433 = vmatprep.subr.mxu0 0.0
    %434 = vmatpush1.msra.mxu0 0.0
    %435 = vmatprep.subr.mxu0 0.0
    %436 = vmatpush1.msra.mxu0 0.0
    %437 = vmatprep.subr.mxu0 0.0
    %438 = vmatpush1.msra.mxu0 0.0
    %439 = vmatprep.subr.mxu0 0.0
    %440 = vmatpush1.msra.mxu0 0.0
    %441 = vmatprep.subr.mxu0 0.0
    %442 = vmatpush1.msra.mxu0 0.0
    %443 = vmatprep.subr.mxu0 0.0
    %444 = vmatpush1.msra.mxu0 0.0
    %445 = vmatprep.subr.mxu0 0.0
    %446 = vmatpush1.msra.mxu0 0.0
    %447 = vmatprep.subr.mxu0 0.0
    %448 = vmatpush1.msra.mxu0 0.0
    %449 = vmatprep.subr.mxu0 0.0
    %450 = vmatpush1.msra.mxu0 0.0
    %451 = vmatprep.subr.mxu0 0.0
    %452 = vmatpush1.msra.mxu0 0.0
    %453 = vmatprep.subr.mxu0 0.0
    %454 = vmatpush1.msra.mxu0 %v414
    %455 = vmatprep.subr.mxu0 0.0
    %456 = vmatpush1.msra.mxu0 %v413
    %457 = vmatprep.subr.mxu0 0.0
    %458 = vmatpush1.msra.mxu0 %v412
    %459 = vmatprep.subr.mxu0 0.0
    %460 = vmatpush1.msra.mxu0 %v411
    %461 = vmatprep.subr.mxu0 0.0
    %462 = vmatpush2.msra.mxu0 0.0
    %463 = vmatprep.subr.mxu0 0.0
    %464 = vmatpush2.msra.mxu0 0.0
    %465 = vmatprep.subr.mxu0 0.0
    %466 = vmatpush2.msra.mxu0 0.0
    %467 = vmatprep.subr.mxu0 0.0
    %468 = vmatpush2.msra.mxu0 0.0
    %469 = vmatprep.subr.mxu0 0.0
    %470 = vmatpush2.msra.mxu0 0.0
    %471 = vmatprep.subr.mxu0 0.0
    %472 = vmatpush2.msra.mxu0 0.0
    %473 = vmatprep.subr.mxu0 0.0
    %474 = vmatpush2.msra.mxu0 0.0
    %475 = vmatprep.subr.mxu0 0.0
    %476 = vmatpush2.msra.mxu0 0.0
    %477 = vmatprep.subr.mxu0 0.0
    %478 = vmatpush2.msra.mxu0 0.0
    %479 = vmatprep.subr.mxu0 0.0
    %480 = vmatpush2.msra.mxu0 0.0
    %481 = vmatprep.subr.mxu0 0.0
    %482 = vmatpush2.msra.mxu0 0.0
    %483 = vmatprep.subr.mxu0 0.0
    %484 = vmatpush2.msra.mxu0 0.0
    %485 = vmatprep.subr.mxu0 0.0
    %486 = vmatpush2.msra.mxu0 0.0
    %487 = vmatprep.subr.mxu0 0.0
    %488 = vmatpush2.msra.mxu0 0.0
    %489 = vmatprep.subr.mxu0 0.0
    %490 = vmatpush2.msra.mxu0 0.0
    %491 = vmatprep.subr.mxu0 0.0
    %492 = vmatpush2.msra.mxu0 0.0
    %493 = vmatprep.mubr.f32.mxu0 0.0
    %494 = vmatmul.mubr.f32.gmra.mxu0 %v424
    %v495 = vpop.f32.mrf.mxu0
    %v496 = vadd.f32 %v420, %v495
    %v497 = vpop.f32.mrf.mxu0
    %498 = vmatprep.mubr.f32.mxu0 0.0
    %499 = vmatmul.mubr.f32.gmra.mxu0 %v427
    %v500 = vpop.f32.mrf.mxu0
    %v501 = vadd.f32 %v420, %v500
    %v502 = vpop.f32.mrf.mxu0
    %503 = vdwg.mxu0
    %504 = vmax.xlane.f32.xlu0 %v496
    %v505 = vpop.xlane.xlu0 %504
    %506 = vmax.xlane.f32.xlu0 %v501
    %v507 = vpop.xlane.xlu0 %506
    %v508 = vsub.f32 %v496, %v505
    %v509 = vsub.f32 %v501, %v507
    %v510 = vmul.f32 %v508, 1.442695
    %v511 = vpow.pop %v510
    %v512 = vmul.f32 %v509, 1.442695
    %v513 = vpow.pop %v512
    %514 = vadd.xlane.f32.xlu0 %v511
    %v515 = vpop.xlane.xlu0 %514
    %516 = vadd.xlane.f32.xlu0 %v513
    %v517 = vpop.xlane.xlu0 %516
    %v518 = vrcp.pop %v515
    %v519 = vrcp.pop %v517
    %v520 = vmul.f32 %v515, %v518
    %v521 = vmul.f32 %v517, %v519
    %v522 = vsub.f32 2.0, %v520
    %v523 = vsub.f32 2.0, %v521
    %v524 = vmul.f32 %v518, %v522
    %v525 = vmul.f32 %v519, %v523
    %v526 = vmul.f32 %v511, %v524
    %v527 = vmul.f32 %v513, %v525
    %528 = vst [vmem:[%s9] sm:$0xff] %v526
    %529 = vst [vmem:[%s9 + $0x8] sm:$0xff] %v527
  $region45: #{d3_forward.1} parent=0 // pred_fallthru
    _
  // Predicated region
  $region46: #{d3_forward.1} parent=0 // pred_check
    _
  $region47: #{d3_forward.1} parent=0 // pred_check_branch
    %531 = sbr.rel (0) target = $region49
  $region48: #{d3_forward.1} parent=0 // pred_region
    _
  $region49: #{d3_forward.1} parent=0 // pred_fallthru
    _
  // Predicated region
  $region50: #{d3_forward.1} parent=0 // pred_check
    _
  $region51: #{d3_forward.1} parent=0 // pred_check_branch
    %533 = sbr.rel (0) target = $region53
  $region52: #{d3_forward.1} parent=0 // pred_region
    _
  $region53: #{d3_forward.1} parent=0 // pred_fallthru
    _

</llo_original>
